<compile_context>
chip_gen: v7x
topology: tpu7x:2x2x1
jax: 0.10.0
libtpu: 0.0.40
codegen_flags: <defaults>
</compile_context>

<pallas_src>
import functools

import jax
import jax.numpy as jnp
from jax.experimental import pallas as pl
from jax.experimental.pallas import tpu as pltpu


LANE_WIDTH = 1024        # lane-dense rows: 8 full 128-lane vregs per f32 row
MAX_BLOCK_ROWS = 512     # (512, 1024) f32 = 2 MiB per block

# murmur3 fmix32 constants, expressed as int32 (two's complement of the u32 hex).
_C1 = -2048144789        # 0x85EBCA6B
_C2 = -1028477379        # 0xC2B2AE35
_INV_2_24 = 1.0 / float(1 << 24)


def _lsr(x, k):
    """Logical right shift by constant k on int32 (mask off sign extension)."""
    return (x >> k) & jnp.int32((1 << (32 - k)) - 1)


def _fmix32(h):
    """murmur3 finalizer: avalanching 32-bit mix (wrapping int32 arithmetic)."""
    h = h ^ _lsr(h, 16)
    h = h * jnp.int32(_C1)
    h = h ^ _lsr(h, 13)
    h = h * jnp.int32(_C2)
    h = h ^ _lsr(h, 16)
    return h


def _spiking_input_kernel(seed_ref, x_ref, o_ref):
    """o = U[0,1) * x on one (block_rows, LANE_WIDTH) tile.

    seed_ref : SMEM scalar-prefetch ref, shape (1,), int32
    x_ref    : VMEM tile (block_rows, LANE_WIDTH), float32
    o_ref    : VMEM tile (block_rows, LANE_WIDTH), float32
    """
    block_rows, lanes = x_ref.shape
    row_off = pl.program_id(0) * block_rows

    # Scalar: hash the seed once so consecutive seeds give unrelated streams.
    key = _fmix32(seed_ref[0])

    # Global element index of every lane in this tile (wraps mod 2^32 — fine,
    # indices stay unique for any realistically sized input).
    row_ids = jax.lax.broadcasted_iota(jnp.int32, (block_rows, lanes), 0) + row_off
    col_ids = jax.lax.broadcasted_iota(jnp.int32, (block_rows, lanes), 1)
    idx = row_ids * jnp.int32(lanes) + col_ids

    # Counter-based (stateless) PRNG: hash(index ^ key), take top 24 bits
    # -> uniform in [0, 1) with 24-bit resolution (torch.rand-equivalent).
    bits = _fmix32(idx ^ key)
    rand01 = _lsr(bits, 8).astype(jnp.float32) * jnp.float32(_INV_2_24)

    o_ref[...] = rand01 * x_ref[...]


@jax.jit
def input_to_spiking_layer(x, seed):
    """JAX/Pallas equivalent of InputDataToSpikingPerceptronLayer.forward.

    x    : (B, C, H, W) float32 (NCHW, like the PyTorch module)
    seed : int32 scalar controlling the random activations
    Returns (B, C*H*W) float32, i.e. rand_like(x_flat) * x_flat.
    """
    B = x.shape[0]
    x_flat = x.reshape(B, -1)              # glue: the .view()
    F = x_flat.shape[1]
    total = B * F

    # Re-layout to a sublane/lane-dense slab (rows, LANE_WIDTH); pad if needed.
    rows = -(-total // LANE_WIDTH)
    block_rows = MAX_BLOCK_ROWS if rows >= MAX_BLOCK_ROWS else rows
    padded_rows = -(-rows // block_rows) * block_rows
    padded_total = padded_rows * LANE_WIDTH

    x_lin = x_flat.reshape(total)
    if padded_total != total:
        x_lin = jnp.pad(x_lin, (0, padded_total - total))
    x_slab = x_lin.reshape(padded_rows, LANE_WIDTH)

    seed_arr = jnp.asarray(seed, dtype=jnp.int32).reshape((1,))
    num_blocks = padded_rows // block_rows

    grid_spec = pltpu.PrefetchScalarGridSpec(
        num_scalar_prefetch=1,                          # seed -> SMEM
        grid=(num_blocks,),
        in_specs=[pl.BlockSpec((block_rows, LANE_WIDTH), lambda i, seed: (i, 0))],
        out_specs=pl.BlockSpec((block_rows, LANE_WIDTH), lambda i, seed: (i, 0)),
    )

    out_slab = pl.pallas_call(
        _spiking_input_kernel,
        out_shape=jax.ShapeDtypeStruct((padded_rows, LANE_WIDTH), jnp.float32),
        grid_spec=grid_spec,
        compiler_params=pltpu.CompilerParams(
            # Stateless per-element hash -> grid steps independent -> megacore OK.
            dimension_semantics=("parallel",),
        ),
        cost_estimate=pl.CostEstimate(
            flops=16 * padded_total,                    # ~a dozen int/f32 ops per elem
            transcendentals=0,
            bytes_accessed=8 * padded_total,            # 4B read + 4B write per elem
        ),
    )(seed_arr, x_slab)

    out = out_slab.reshape(padded_total)
    if padded_total != total:
        out = out[:total]
    return out.reshape(B, F)


if __name__ == "__main__":
    # Small shapes consistent with the module: NCHW input, batch=2, ch=4, 16x16.
    key = jax.random.PRNGKey(0)
    x = jax.random.normal(key, (2, 4, 16, 16), dtype=jnp.float32)

    out = input_to_spiking_layer(x, jnp.int32(42))
    out = jax.block_until_ready(out)

    B = x.shape[0]
    x_flat = x.reshape(B, -1)

    # Shape matches the flattened input (torch output shape).
    assert out.shape == x_flat.shape
    assert bool(jnp.all(jnp.isfinite(out)))
    # r in [0,1) => |r*x| <= |x| elementwise.
    assert bool(jnp.all(jnp.abs(out) <= jnp.abs(x_flat) + 1e-6))
    # Recovered r = out/x should lie in [0,1) and look uniform-ish.
    mask = jnp.abs(x_flat) > 1e-3
    r = jnp.where(mask, out / x_flat, 0.5)
    assert bool(jnp.all((r >= -1e-6) & (r < 1.0 + 1e-5)))
    r_mean = float(jnp.sum(jnp.where(mask, r, 0.0)) / jnp.maximum(jnp.sum(mask), 1))
    assert 0.35 < r_mean < 0.65, r_mean

    print("KERNEL_OK")
</pallas_src>

<mosaic_0001>
module attributes {stable_mosaic.version = 11 : i64} {
  func.func @_spiking_input_kernel(%arg0: i32, %arg1: memref<1xi32, #tpu.memory_space<smem>>, %arg2: memref<2x1024xf32, #tpu.memory_space<vmem>>, %arg3: memref<2x1024xf32, #tpu.memory_space<vmem>>) attributes {dimension_semantics = [#tpu.dimension_semantics<parallel>], iteration_bounds = array<i64: 1>, scalar_prefetch = 1 : i64, scratch_operands = 0 : i64, tpu.core_type = #tpu.core_type<tc>, window_params = [{transform_indices = @transform_0, window_bounds = array<i64: 2, 1024>}, {transform_indices = @transform_1, window_bounds = array<i64: 2, 1024>}]} {
    %c2_i32 = arith.constant 2 : i32
    %0 = arith.muli %arg0, %c2_i32 : i32
    %c0 = arith.constant 0 : index
    %1 = memref.load %arg1[%c0] : memref<1xi32, #tpu.memory_space<smem>>
    %c16_i32 = arith.constant 16 : i32
    %2 = arith.shrsi %1, %c16_i32 : i32
    %c65535_i32 = arith.constant 65535 : i32
    %3 = arith.andi %2, %c65535_i32 : i32
    %4 = arith.xori %1, %3 : i32
    %c-2048144789_i32 = arith.constant -2048144789 : i32
    %5 = arith.muli %4, %c-2048144789_i32 : i32
    %c13_i32 = arith.constant 13 : i32
    %6 = arith.shrsi %5, %c13_i32 : i32
    %c524287_i32 = arith.constant 524287 : i32
    %7 = arith.andi %6, %c524287_i32 : i32
    %8 = arith.xori %5, %7 : i32
    %c-1028477379_i32 = arith.constant -1028477379 : i32
    %9 = arith.muli %8, %c-1028477379_i32 : i32
    %c16_i32_0 = arith.constant 16 : i32
    %10 = arith.shrsi %9, %c16_i32_0 : i32
    %c65535_i32_1 = arith.constant 65535 : i32
    %11 = arith.andi %10, %c65535_i32_1 : i32
    %12 = arith.xori %9, %11 : i32
    %13 = tpu.iota {dimensions = array<i32: 0>} : vector<2x1024xi32>
    %14 = vector.broadcast %0 : i32 to vector<2x1024xi32>
    %15 = arith.addi %13, %14 : vector<2x1024xi32>
    %16 = tpu.iota {dimensions = array<i32: 1>} : vector<2x1024xi32>
    %c1024_i32 = arith.constant 1024 : i32
    %17 = vector.broadcast %c1024_i32 : i32 to vector<2x1024xi32>
    %18 = arith.muli %15, %17 : vector<2x1024xi32>
    %19 = arith.addi %18, %16 : vector<2x1024xi32>
    %20 = vector.broadcast %12 : i32 to vector<2x1024xi32>
    %21 = arith.xori %19, %20 : vector<2x1024xi32>
    %c16_i32_2 = arith.constant 16 : i32
    %22 = vector.broadcast %c16_i32_2 : i32 to vector<2x1024xi32>
    %23 = arith.shrsi %21, %22 : vector<2x1024xi32>
    %c65535_i32_3 = arith.constant 65535 : i32
    %24 = vector.broadcast %c65535_i32_3 : i32 to vector<2x1024xi32>
    %25 = arith.andi %23, %24 : vector<2x1024xi32>
    %26 = arith.xori %21, %25 : vector<2x1024xi32>
    %c-2048144789_i32_4 = arith.constant -2048144789 : i32
    %27 = vector.broadcast %c-2048144789_i32_4 : i32 to vector<2x1024xi32>
    %28 = arith.muli %26, %27 : vector<2x1024xi32>
    %c13_i32_5 = arith.constant 13 : i32
    %29 = vector.broadcast %c13_i32_5 : i32 to vector<2x1024xi32>
    %30 = arith.shrsi %28, %29 : vector<2x1024xi32>
    %c524287_i32_6 = arith.constant 524287 : i32
    %31 = vector.broadcast %c524287_i32_6 : i32 to vector<2x1024xi32>
    %32 = arith.andi %30, %31 : vector<2x1024xi32>
    %33 = arith.xori %28, %32 : vector<2x1024xi32>
    %c-1028477379_i32_7 = arith.constant -1028477379 : i32
    %34 = vector.broadcast %c-1028477379_i32_7 : i32 to vector<2x1024xi32>
    %35 = arith.muli %33, %34 : vector<2x1024xi32>
    %c16_i32_8 = arith.constant 16 : i32
    %36 = vector.broadcast %c16_i32_8 : i32 to vector<2x1024xi32>
    %37 = arith.shrsi %35, %36 : vector<2x1024xi32>
    %c65535_i32_9 = arith.constant 65535 : i32
    %38 = vector.broadcast %c65535_i32_9 : i32 to vector<2x1024xi32>
    %39 = arith.andi %37, %38 : vector<2x1024xi32>
    %40 = arith.xori %35, %39 : vector<2x1024xi32>
    %c8_i32 = arith.constant 8 : i32
    %41 = vector.broadcast %c8_i32 : i32 to vector<2x1024xi32>
    %42 = arith.shrsi %40, %41 : vector<2x1024xi32>
    %c16777215_i32 = arith.constant 16777215 : i32
    %43 = vector.broadcast %c16777215_i32 : i32 to vector<2x1024xi32>
    %44 = arith.andi %42, %43 : vector<2x1024xi32>
    %45 = arith.sitofp %44 : vector<2x1024xi32> to vector<2x1024xf32>
    %cst = arith.constant 5.96046448E-8 : f32
    %46 = vector.broadcast %cst : f32 to vector<2x1024xf32>
    %47 = arith.mulf %45, %46 : vector<2x1024xf32>
    %c0_10 = arith.constant 0 : index
    %c0_11 = arith.constant 0 : index
    %48 = vector.load %arg2[%c0_10, %c0_11] : memref<2x1024xf32, #tpu.memory_space<vmem>>, vector<2x1024xf32>
    %49 = arith.mulf %47, %48 : vector<2x1024xf32>
    %c0_12 = arith.constant 0 : index
    %c0_13 = arith.constant 0 : index
    %50 = vector.load %arg3[%c0_12, %c0_13] : memref<2x1024xf32, #tpu.memory_space<vmem>>, vector<2x1024xf32>
    tpu.vector_store %arg3[%c0_12, %c0_13], %49 {strides = array<i32>} : memref<2x1024xf32, #tpu.memory_space<vmem>>, vector<2x1024xf32>,
    return
  }
  func.func @transform_0(%arg0: i32, %arg1: memref<1xi32, #tpu.memory_space<smem>>) -> (i32, i32) {
    %c0_i32 = arith.constant 0 : i32
    %c0_i32_0 = arith.constant 0 : i32
    return %arg0, %c0_i32 : i32, i32
  }
  func.func @transform_1(%arg0: i32, %arg1: memref<1xi32, #tpu.memory_space<smem>>) -> (i32, i32) {
    %c0_i32 = arith.constant 0 : i32
    %c0_i32_0 = arith.constant 0 : i32
    return %arg0, %c0_i32 : i32, i32
  }
}

</mosaic_0001>

<llo_original>
// kernel: input_to_spiking_layer.1
$region0: #{input_to_spiking_layer.1}
  #allocation0 [shape = 'u32[]', space=smem, size = 0x4, offset = 0x4, fixed_abs, tag = 'smem constant byte address 0x4 - core index']
  #allocation1 [shape = 'u32[144,128]{1,0:T(1,128)}', space=vmem, size = 0x12000, scoped, tag = 'internal scratch']
  #allocation2 [shape = 's32[1]{0}', space=sflag, size = 0x4, scoped, tag = 'scoped memory for input_to_spiking_layer.1']
  #allocation3 [shape = 's32[1]{0:T(128)S(6)}', space=smem, size = 0x200, scoped, tag = 'prefetched SMEM operand 0']
  %s0 = inlined_call_operand.<no memory space> [shape: s32[1], index: 0, kind: input, shape index: {}]
  %s1 = inlined_call_operand.vmem [shape: f32[2,1024], index: 1, kind: input, shape index: {}]
  %s2 = inlined_call_operand.hbm [shape: f32[2,1024], index: 2, kind: output, shape index: {}]
  %s3 = sld [smem:[#allocation0]]
  $region14: #{input_to_spiking_layer.1} parent=0
    _
  %s5 = ssub.s32 1, %s3
  %s6 = scalar_select 0, %s5, %s3
  %7 = sst [smem:[#allocation3]] %s0
  $region1: #{input_to_spiking_layer.1} parent=0
    #allocation4 [shape = 'u8[8192]{0}', space=vmem, size = 0x2000, scoped, tag = 'output window, operand 0, single buffered']
    #allocation5 [shape = 's32[1]{0}', space=sflag, size = 0x4, scoped, tag = 'scoped memory for input_to_spiking_layer.1']
    %8 = vsyncpa [#allocation5], 0
    // Predicated region
    $region2: #{input_to_spiking_layer.1} parent=1 // pred_check
      _
    $region3: #{input_to_spiking_layer.1} parent=1 // pred_check_branch
      %10 = sbr.rel (0) target = $region5
    $region4: #{input_to_spiking_layer.1} parent=1 // pred_region
      _
    $region5: #{input_to_spiking_layer.1} parent=1 // pred_fallthru
      _
    %s11 = smul.u32 0, 2
    %s12 = sld [smem:[#allocation3]]
    %s13 = sshra.s32 %s12, 16
    %s14 = sand.u32 %s13, 65535
    %s15 = sxor.u32 %s12, %s14
    %s16 = smul.u32 %s15, 2246822507
    %s17 = sshra.s32 %s16, 13
    %s18 = sand.u32 %s17, 524287
    %s19 = sxor.u32 %s16, %s18
    %s20 = smul.u32 %s19, 3266489917
    %s21 = sshra.s32 %s20, 16
    %s22 = sand.u32 %s21, 65535
    %s23 = sxor.u32 %s20, %s22
    %v24 = vlaneseq
    %v25 = vshrl.u32 %v24, 7
    %v26 = vstv %s11
    %v27 = vadd.s32 %v25, %v26
    %v28 = vlaneseq
    %v29 = vand.u32 %v28, 127
    %v30 = vadd.s32 %v29, 128
    %v31 = vadd.s32 %v29, 256
    %v32 = vadd.s32 %v29, 384
    %v33 = vadd.s32 %v29, 512
    %v34 = vadd.s32 %v29, 640
    %v35 = vadd.s32 %v29, 768
    %v36 = vadd.s32 %v29, 896
    %v37 = vmul.u32 %v27, 1024
    %v38 = vadd.s32 %v37, %v29
    %v39 = vadd.s32 %v37, %v30
    %v40 = vadd.s32 %v37, %v31
    %v41 = vadd.s32 %v37, %v32
    %v42 = vadd.s32 %v37, %v33
    %v43 = vadd.s32 %v37, %v34
    %v44 = vadd.s32 %v37, %v35
    %v45 = vadd.s32 %v37, %v36
    %v46 = vstv %s23
    %v47 = vxor.u32 %v38, %v46
    %v48 = vxor.u32 %v39, %v46
    %v49 = vxor.u32 %v40, %v46
    %v50 = vxor.u32 %v41, %v46
    %v51 = vxor.u32 %v42, %v46
    %v52 = vxor.u32 %v43, %v46
    %v53 = vxor.u32 %v44, %v46
    %v54 = vxor.u32 %v45, %v46
    %v55 = vshra.s32 %v47, 16
    %v56 = vshra.s32 %v48, 16
    %v57 = vshra.s32 %v49, 16
    %v58 = vshra.s32 %v50, 16
    %v59 = vshra.s32 %v51, 16
    %v60 = vshra.s32 %v52, 16
    %v61 = vshra.s32 %v53, 16
    %v62 = vshra.s32 %v54, 16
    %v63 = vand.u32 %v55, 65535
    %v64 = vand.u32 %v56, 65535
    %v65 = vand.u32 %v57, 65535
    %v66 = vand.u32 %v58, 65535
    %v67 = vand.u32 %v59, 65535
    %v68 = vand.u32 %v60, 65535
    %v69 = vand.u32 %v61, 65535
    %v70 = vand.u32 %v62, 65535
    %v71 = vxor.u32 %v47, %v63
    %v72 = vxor.u32 %v48, %v64
    %v73 = vxor.u32 %v49, %v65
    %v74 = vxor.u32 %v50, %v66
    %v75 = vxor.u32 %v51, %v67
    %v76 = vxor.u32 %v52, %v68
    %v77 = vxor.u32 %v53, %v69
    %v78 = vxor.u32 %v54, %v70
    %v79 = vmul.u32 %v71, 2246822507
    %v80 = vmul.u32 %v72, 2246822507
    %v81 = vmul.u32 %v73, 2246822507
    %v82 = vmul.u32 %v74, 2246822507
    %v83 = vmul.u32 %v75, 2246822507
    %v84 = vmul.u32 %v76, 2246822507
    %v85 = vmul.u32 %v77, 2246822507
    %v86 = vmul.u32 %v78, 2246822507
    %v87 = vshra.s32 %v79, 13
    %v88 = vshra.s32 %v80, 13
    %v89 = vshra.s32 %v81, 13
    %v90 = vshra.s32 %v82, 13
    %v91 = vshra.s32 %v83, 13
    %v92 = vshra.s32 %v84, 13
    %v93 = vshra.s32 %v85, 13
    %v94 = vshra.s32 %v86, 13
    %v95 = vand.u32 %v87, 524287
    %v96 = vand.u32 %v88, 524287
    %v97 = vand.u32 %v89, 524287
    %v98 = vand.u32 %v90, 524287
    %v99 = vand.u32 %v91, 524287
    %v100 = vand.u32 %v92, 524287
    %v101 = vand.u32 %v93, 524287
    %v102 = vand.u32 %v94, 524287
    %v103 = vxor.u32 %v79, %v95
    %v104 = vxor.u32 %v80, %v96
    %v105 = vxor.u32 %v81, %v97
    %v106 = vxor.u32 %v82, %v98
    %v107 = vxor.u32 %v83, %v99
    %v108 = vxor.u32 %v84, %v100
    %v109 = vxor.u32 %v85, %v101
    %v110 = vxor.u32 %v86, %v102
    %v111 = vmul.u32 %v103, 3266489917
    %v112 = vmul.u32 %v104, 3266489917
    %v113 = vmul.u32 %v105, 3266489917
    %v114 = vmul.u32 %v106, 3266489917
    %v115 = vmul.u32 %v107, 3266489917
    %v116 = vmul.u32 %v108, 3266489917
    %v117 = vmul.u32 %v109, 3266489917
    %v118 = vmul.u32 %v110, 3266489917
    %v119 = vshra.s32 %v111, 16
    %v120 = vshra.s32 %v112, 16
    %v121 = vshra.s32 %v113, 16
    %v122 = vshra.s32 %v114, 16
    %v123 = vshra.s32 %v115, 16
    %v124 = vshra.s32 %v116, 16
    %v125 = vshra.s32 %v117, 16
    %v126 = vshra.s32 %v118, 16
    %v127 = vand.u32 %v119, 65535
    %v128 = vand.u32 %v120, 65535
    %v129 = vand.u32 %v121, 65535
    %v130 = vand.u32 %v122, 65535
    %v131 = vand.u32 %v123, 65535
    %v132 = vand.u32 %v124, 65535
    %v133 = vand.u32 %v125, 65535
    %v134 = vand.u32 %v126, 65535
    %v135 = vxor.u32 %v111, %v127
    %v136 = vxor.u32 %v112, %v128
    %v137 = vxor.u32 %v113, %v129
    %v138 = vxor.u32 %v114, %v130
    %v139 = vxor.u32 %v115, %v131
    %v140 = vxor.u32 %v116, %v132
    %v141 = vxor.u32 %v117, %v133
    %v142 = vxor.u32 %v118, %v134
    %v143 = vshra.s32 %v135, 8
    %v144 = vshra.s32 %v136, 8
    %v145 = vshra.s32 %v137, 8
    %v146 = vshra.s32 %v138, 8
    %v147 = vshra.s32 %v139, 8
    %v148 = vshra.s32 %v140, 8
    %v149 = vshra.s32 %v141, 8
    %v150 = vshra.s32 %v142, 8
    %v151 = vand.u32 %v143, 16777215
    %v152 = vand.u32 %v144, 16777215
    %v153 = vand.u32 %v145, 16777215
    %v154 = vand.u32 %v146, 16777215
    %v155 = vand.u32 %v147, 16777215
    %v156 = vand.u32 %v148, 16777215
    %v157 = vand.u32 %v149, 16777215
    %v158 = vand.u32 %v150, 16777215
    %v159 = vcvt.s32.f32 %v151
    %v160 = vcvt.s32.f32 %v152
    %v161 = vcvt.s32.f32 %v153
    %v162 = vcvt.s32.f32 %v154
    %v163 = vcvt.s32.f32 %v155
    %v164 = vcvt.s32.f32 %v156
    %v165 = vcvt.s32.f32 %v157
    %v166 = vcvt.s32.f32 %v158
    %v167 = vmul.f32 %v159, 5.9604645e-08
    %v168 = vmul.f32 %v160, 5.9604645e-08
    %v169 = vmul.f32 %v161, 5.9604645e-08
    %v170 = vmul.f32 %v162, 5.9604645e-08
    %v171 = vmul.f32 %v163, 5.9604645e-08
    %v172 = vmul.f32 %v164, 5.9604645e-08
    %v173 = vmul.f32 %v165, 5.9604645e-08
    %v174 = vmul.f32 %v166, 5.9604645e-08
    %v175 = vld [vmem:[%s1] sm:$0xff]
    %v176 = vld [vmem:[%s1 + $0x8] sm:$0xff]
    %v179 = vcombine.high %v175, %v175
    %v181 = vunpack.c.l.s4 1983009808
    %v182 = vunpack.c.0.s8 %v181
    %v183 = vlaneseq
    %v184 = vshrl.u32 %v183, 7
    %v185 = vsub.s32 %v182, %v184
    %v186 = vrot.slane %v175, %v185
    %v188 = vunpack.c.l.s4 1983009808
    %v189 = vunpack.c.0.s8 %v188
    %v190 = vlaneseq
    %v191 = vshrl.u32 %v190, 7
    %v192 = vsub.s32 %v189, %v191
    %v193 = vrot.slane %v179, %v192
    %v194 = vcombine.high %v186, %v186
    %v195 = vcombine.high %v193, %v193
    %v196 = vcombine.high %v176, %v176
    %v198 = vunpack.c.l.s4 1983009808
    %v199 = vunpack.c.0.s8 %v198
    %v200 = vlaneseq
    %v201 = vshrl.u32 %v200, 7
    %v202 = vsub.s32 %v199, %v201
    %v203 = vrot.slane %v176, %v202
    %v205 = vunpack.c.l.s4 1983009808
    %v206 = vunpack.c.0.s8 %v205
    %v207 = vlaneseq
    %v208 = vshrl.u32 %v207, 7
    %v209 = vsub.s32 %v206, %v208
    %v210 = vrot.slane %v196, %v209
    %v211 = vcombine.high %v203, %v203
    %v212 = vcombine.high %v210, %v210
    %v221 = vmul.f32 %v167, %v186
    %v222 = vmul.f32 %v168, %v194
    %v223 = vmul.f32 %v169, %v193
    %v224 = vmul.f32 %v170, %v195
    %v225 = vmul.f32 %v171, %v203
    %v226 = vmul.f32 %v172, %v211
    %v227 = vmul.f32 %v173, %v210
    %v228 = vmul.f32 %v174, %v212
    %v237 = vcombine.low %v221, %v222
    %v238 = vcombine.low %v223, %v224
    %v240 = vunpack.c.l.s4 1983009808
    %v241 = vunpack.c.0.s8 %v240
    %v242 = vlaneseq
    %v243 = vshrl.u32 %v242, 7
    %v244 = vsub.s32 %v241, %v243
    %v245 = vrot.slane %v237, %v244
    %v247 = vunpack.c.l.s4 1983009808
    %v248 = vunpack.c.0.s8 %v247
    %v249 = vlaneseq
    %v250 = vshrl.u32 %v249, 7
    %v251 = vsub.s32 %v248, %v250
    %v252 = vrot.slane %v238, %v251
    %v253 = vcombine.low %v245, %v252
    %v254 = vcombine.low %v225, %v226
    %v255 = vcombine.low %v227, %v228
    %v257 = vunpack.c.l.s4 1983009808
    %v258 = vunpack.c.0.s8 %v257
    %v259 = vlaneseq
    %v260 = vshrl.u32 %v259, 7
    %v261 = vsub.s32 %v258, %v260
    %v262 = vrot.slane %v254, %v261
    %v264 = vunpack.c.l.s4 1983009808
    %v265 = vunpack.c.0.s8 %v264
    %v266 = vlaneseq
    %v267 = vshrl.u32 %v266, 7
    %v268 = vsub.s32 %v265, %v267
    %v269 = vrot.slane %v255, %v268
    %v270 = vcombine.low %v262, %v269
    %273 = vst [vmem:[#allocation4] sm:$0xff] %v253
    %274 = vst [vmem:[#allocation4 + $0x8] sm:$0xff] %v270
    // Predicated region
    $region6: #{input_to_spiking_layer.1} parent=1 // pred_check
      _
    $region7: #{input_to_spiking_layer.1} parent=1 // pred_check_branch
      %276 = sbr.rel (0) target = $region9
    $region8: #{input_to_spiking_layer.1} parent=1 // pred_region
      %s278 = ssub.s32 256, 256
      %279 = vsyncadd [#allocation5], %s278
      %s281 = sshll.u32 [#allocation4], 4
      %s282 = int_to_ptr.vmem [resolvable:$true] %s281
      %284 = dma.vmem_to_hbm [thread:$0]  %s282, 256, %s2, [#allocation5]
    $region9: #{input_to_spiking_layer.1} parent=1 // pred_fallthru
      _
    // Predicated region
    $region10: #{input_to_spiking_layer.1} parent=1 // pred_check
      _
    $region11: #{input_to_spiking_layer.1} parent=1 // pred_check_branch
      %286 = sbr.rel (0) target = $region13
    $region12: #{input_to_spiking_layer.1} parent=1 // pred_region
      %287 = dma.done [#allocation5], 256
    $region13: #{input_to_spiking_layer.1} parent=1 // pred_fallthru
      _
    %288 = vsyncpa [#allocation5], 1

</llo_original>
